<compile_context>
chip_gen: v7x
topology: tpu7x:2x2x1
jax: 0.10.0
libtpu: 0.0.40
codegen_flags: <defaults>
</compile_context>

<pallas_src>
import math
from functools import partial

import jax
import jax.numpy as jnp
from jax.experimental import pallas as pl
from jax.experimental.pallas import tpu as pltpu


# ---------------------------------------------------------------------------
# Head-count helpers (mirrors the PyTorch module's __init__ logic, tp_degree=1)
# ---------------------------------------------------------------------------
def get_number_of_extra_heads(num_attention_heads, tp_degree):
    if num_attention_heads % tp_degree == 0:
        return 0
    return tp_degree - (num_attention_heads % tp_degree)


def get_shardable_head_counts(tp_degree, num_attention_heads, num_key_value_heads):
    updated_q = num_attention_heads + get_number_of_extra_heads(num_attention_heads, tp_degree)
    updated_kv = num_key_value_heads
    if num_attention_heads == num_key_value_heads:
        updated_kv = updated_q
    elif num_key_value_heads < tp_degree or num_key_value_heads % tp_degree != 0:
        # REPLICATE_TO_TP_DEGREE path (tp_degree=1 never hits this branch)
        updated_kv = tp_degree
    return updated_q, updated_kv


def _round_up(x, m):
    return ((x + m - 1) // m) * m


# ---------------------------------------------------------------------------
# Pallas kernels
# ---------------------------------------------------------------------------
def _linear_kernel_acc(x_ref, w_ref, o_ref, acc_ref):
    # grid = (M tiles, N tiles, K tiles); K (reduction) is last & "arbitrary".
    @pl.when(pl.program_id(2) == 0)
    def _():
        acc_ref[...] = jnp.zeros_like(acc_ref)

    acc_ref[...] += jnp.dot(
        x_ref[...], w_ref[...], preferred_element_type=jnp.float32
    )

    @pl.when(pl.program_id(2) == pl.num_programs(2) - 1)
    def _():
        o_ref[...] = acc_ref[...].astype(o_ref.dtype)


def _linear_kernel_single_k(x_ref, w_ref, o_ref):
    # Whole reduction in one tile: no accumulator scratch, no branches.
    o_ref[...] = jnp.dot(
        x_ref[...], w_ref[...], preferred_element_type=jnp.float32
    ).astype(o_ref.dtype)


@jax.jit
def gqa_o_proj(attention_output, w_t):
    """O = attention_output @ w_t   (nn.Linear with bias=False).

    attention_output: [batch, seq, num_heads*head_dim]
    w_t:              [num_heads*head_dim, hidden_size]  (pre-transposed, [K, N])
    returns:          [batch, seq, hidden_size]
    """
    B, S, K = attention_output.shape
    K_w, N = w_t.shape
    assert K == K_w, "in_features mismatch"

    M = B * S
    x = attention_output.reshape(M, K)

    # Tile targets: MXU-friendly, bounded VMEM (fits v7x's 64 MiB budget too).
    TM, TN, TK = 256, 512, 1024
    tm = TM if M >= TM else _round_up(M, 8)
    tn = TN if N >= TN else _round_up(N, 128)
    tk = TK if K >= TK else _round_up(K, 128)

    M_pad = _round_up(M, tm)
    N_pad = _round_up(N, tn)
    K_pad = _round_up(K, tk)

    # Zero-pad remainders (zero K-padding adds nothing to the reduction;
    # padded M rows / N cols are sliced off below).
    if (M_pad, K_pad) != (M, K):
        x = jnp.pad(x, ((0, M_pad - M), (0, K_pad - K)))
    if (K_pad, N_pad) != (K, N):
        w_t = jnp.pad(w_t, ((0, K_pad - K), (0, N_pad - N)))

    itemsize = jnp.dtype(attention_output.dtype).itemsize
    n_k_tiles = K_pad // tk
    single_k = n_k_tiles == 1

    # double-buffered x/w/out tiles (+ f32 accumulator on the reduction path)
    vmem_bytes = 2 * (tm * tk + tk * tn + tm * tn) * itemsize
    if not single_k:
        vmem_bytes += tm * tn * 4
    vmem_limit = int(min(max(2 * vmem_bytes, 16 << 20), 64 << 20))

    cost = pl.CostEstimate(
        flops=2 * M_pad * K_pad * N_pad,
        transcendentals=0,
        bytes_accessed=(M_pad * K_pad
                        + (M_pad // tm) * K_pad * N_pad
                        + M_pad * N_pad) * itemsize,
    )

    if single_k:
        # 2-D grid, both axes independent (megacore-parallel), direct store.
        grid = (M_pad // tm, N_pad // tn)
        grid_spec = pltpu.PrefetchScalarGridSpec(
            num_scalar_prefetch=0,
            grid=grid,
            in_specs=[
                pl.BlockSpec((tm, tk), lambda i, j: (i, 0)),
                pl.BlockSpec((tk, tn), lambda i, j: (0, j)),
            ],
            out_specs=pl.BlockSpec((tm, tn), lambda i, j: (i, j)),
        )
        kernel = _linear_kernel_single_k
        dim_sem = ("parallel", "parallel")
    else:
        # 3-D grid, reduction axis last ("arbitrary"), f32 accumulator.
        grid = (M_pad // tm, N_pad // tn, n_k_tiles)
        grid_spec = pltpu.PrefetchScalarGridSpec(
            num_scalar_prefetch=0,
            grid=grid,
            in_specs=[
                pl.BlockSpec((tm, tk), lambda i, j, k: (i, k)),
                pl.BlockSpec((tk, tn), lambda i, j, k: (k, j)),
            ],
            out_specs=pl.BlockSpec((tm, tn), lambda i, j, k: (i, j)),
            scratch_shapes=[pltpu.VMEM((tm, tn), jnp.float32)],
        )
        kernel = _linear_kernel_acc
        dim_sem = ("parallel", "parallel", "arbitrary")

    out = pl.pallas_call(
        kernel,
        out_shape=jax.ShapeDtypeStruct((M_pad, N_pad), attention_output.dtype),
        grid_spec=grid_spec,
        compiler_params=pltpu.CompilerParams(
            dimension_semantics=dim_sem,
            vmem_limit_bytes=vmem_limit,
        ),
        cost_estimate=cost,
    )(x, w_t)

    if (M_pad, N_pad) != (M, N):
        out = out[:M, :N]
    return out.reshape(B, S, N)


# ---------------------------------------------------------------------------
# Module-equivalent wrapper with deterministic parameter init
# ---------------------------------------------------------------------------
class GroupQueryAttentionO:
    def __init__(self, hidden_size, head_dim, num_attention_heads,
                 num_key_value_heads, tp_degree=1, bias=False, key=None):
        self.hidden_size = hidden_size
        self.head_dim = head_dim
        self.tp_degree = tp_degree
        self.num_attention_heads, self.num_key_value_heads = get_shardable_head_counts(
            tp_degree, num_attention_heads, num_key_value_heads
        )
        in_features = self.num_attention_heads * self.head_dim
        # nn.Linear default init: U(-1/sqrt(in), 1/sqrt(in)), deterministic via PRNGKey
        bound = 1.0 / math.sqrt(in_features)
        key = key if key is not None else jax.random.PRNGKey(0)
        wkey, _ = jax.random.split(key)
        self.weight = jax.random.uniform(
            wkey, (hidden_size, in_features), dtype=jnp.float32,
            minval=-bound, maxval=bound,
        )
        # Pre-transpose ONCE at init (kernel-friendly [K, N] layout) so no
        # transposed HBM copy of the weight is materialized on every forward.
        self.weight_t = jnp.asarray(self.weight.T)
        # bias=False in this config (module default); no bias parameter.
        assert not bias  # TODO(synk): add bias path if bias=True is needed

    def __call__(self, attention_output):
        return gqa_o_proj(attention_output, self.weight_t)


if __name__ == "__main__":
    # ------------------------------------------------------------------
    # 1) Small shapes consistent with the module (single-K fast path)
    # ------------------------------------------------------------------
    batch, seq = 2, 8
    hidden_size = 32
    head_dim = 8
    num_attention_heads = 4
    num_key_value_heads = 2

    key = jax.random.PRNGKey(0)
    k_mod, k_in, k_mod2, k_in2 = jax.random.split(key, 4)

    module = GroupQueryAttentionO(
        hidden_size=hidden_size,
        head_dim=head_dim,
        num_attention_heads=num_attention_heads,
        num_key_value_heads=num_key_value_heads,
        tp_degree=1,
        bias=False,
        key=k_mod,
    )

    in_features = module.num_attention_heads * module.head_dim  # 32
    attention_output = jax.random.normal(
        k_in, (batch, seq, in_features), dtype=jnp.float32
    )

    out = jax.block_until_ready(module(attention_output))
    ref = attention_output @ module.weight.T
    assert out.shape == (batch, seq, hidden_size)
    assert jnp.allclose(out, ref, atol=1e-5, rtol=1e-5)

    # ------------------------------------------------------------------
    # 2) Modest shape exercising the K-reduction (accumulator) path
    #    K = 16 heads * 128 head_dim = 2048 -> two K tiles of 1024.
    # ------------------------------------------------------------------
    module2 = GroupQueryAttentionO(
        hidden_size=256,
        head_dim=128,
        num_attention_heads=16,
        num_key_value_heads=16,
        tp_degree=1,
        bias=False,
        key=k_mod2,
    )
    x2 = jax.random.normal(
        k_in2, (2, 8, module2.num_attention_heads * module2.head_dim),
        dtype=jnp.float32,
    )
    out2 = jax.block_until_ready(module2(x2))
    ref2 = x2 @ module2.weight.T
    assert out2.shape == (2, 8, 256)
    assert jnp.allclose(out2, ref2, atol=1e-4, rtol=1e-4)

    print("KERNEL_OK")
</pallas_src>

<mosaic_0001>
module attributes {stable_mosaic.version = 11 : i64} {
  func.func @_linear_kernel_single_k(%arg0: i32, %arg1: i32, %arg2: memref<16x128xf32, #tpu.memory_space<vmem>>, %arg3: memref<128x128xf32, #tpu.memory_space<vmem>>, %arg4: memref<16x128xf32, #tpu.memory_space<vmem>>) attributes {dimension_semantics = [#tpu.dimension_semantics<parallel>, #tpu.dimension_semantics<parallel>], iteration_bounds = array<i64: 1, 1>, scalar_prefetch = 0 : i64, scratch_operands = 0 : i64, tpu.core_type = #tpu.core_type<tc>, window_params = [{transform_indices = @transform_0, window_bounds = array<i64: 16, 128>}, {transform_indices = @transform_1, window_bounds = array<i64: 128, 128>}, {transform_indices = @transform_2, window_bounds = array<i64: 16, 128>}]} {
    %c0 = arith.constant 0 : index
    %c0_0 = arith.constant 0 : index
    %0 = vector.load %arg2[%c0, %c0_0] : memref<16x128xf32, #tpu.memory_space<vmem>>, vector<16x128xf32>
    %c0_1 = arith.constant 0 : index
    %c0_2 = arith.constant 0 : index
    %1 = vector.load %arg3[%c0_1, %c0_2] : memref<128x128xf32, #tpu.memory_space<vmem>>, vector<128x128xf32>
    %cst = arith.constant dense<0.000000e+00> : vector<16x128xf32>
    %2 = tpu.matmul %0, %1, %cst {dimension_numbers = #tpu.dot_dimension_numbers<[1], [0], [0], [1], [0, 0, 1, 1], [], []>} : vector<16x128xf32>, vector<128x128xf32>, vector<16x128xf32> -> vector<16x128xf32>
    %c0_3 = arith.constant 0 : index
    %c0_4 = arith.constant 0 : index
    %3 = vector.load %arg4[%c0_3, %c0_4] : memref<16x128xf32, #tpu.memory_space<vmem>>, vector<16x128xf32>
    tpu.vector_store %arg4[%c0_3, %c0_4], %2 {strides = array<i32>} : memref<16x128xf32, #tpu.memory_space<vmem>>, vector<16x128xf32>,
    return
  }
  func.func @transform_0(%arg0: i32, %arg1: i32) -> (i32, i32) {
    %c0_i32 = arith.constant 0 : i32
    %c0_i32_0 = arith.constant 0 : i32
    return %arg0, %c0_i32 : i32, i32
  }
  func.func @transform_1(%arg0: i32, %arg1: i32) -> (i32, i32) {
    %c0_i32 = arith.constant 0 : i32
    %c0_i32_0 = arith.constant 0 : i32
    return %c0_i32, %arg1 : i32, i32
  }
  func.func @transform_2(%arg0: i32, %arg1: i32) -> (i32, i32) {
    %c0_i32 = arith.constant 0 : i32
    return %arg0, %arg1 : i32, i32
  }
}

</mosaic_0001>

<llo_original>
// kernel: gqa_o_proj.1
$region0: #{gqa_o_proj.1}
  #allocation0 [shape = 'u32[]', space=smem, size = 0x4, offset = 0x4, fixed_abs, tag = 'smem constant byte address 0x4 - core index']
  #allocation1 [shape = 'u32[144,128]{1,0:T(1,128)}', space=vmem, size = 0x12000, scoped, tag = 'internal scratch']
  %s0 = inlined_call_operand.vmem [shape: f32[16,128], index: 0, kind: input, shape index: {}]
  %s1 = inlined_call_operand.vmem [shape: f32[128,128], index: 1, kind: input, shape index: {}]
  %s2 = inlined_call_operand.vmem [shape: f32[16,128], index: 2, kind: output, shape index: {}]
  %s3 = sld [smem:[#allocation0]]
  $region18: #{gqa_o_proj.1} parent=0
    _
  %s5 = ssub.s32 1, %s3
  %s6 = scalar_select 0, %s5, %s3
  // Predicated region
  $region2: #{gqa_o_proj.1} parent=0 // pred_check
    _
  $region3: #{gqa_o_proj.1} parent=0 // pred_check_branch
    %8 = sbr.rel (0) target = $region5
  $region4: #{gqa_o_proj.1} parent=0 // pred_region
    _
  $region5: #{gqa_o_proj.1} parent=0 // pred_fallthru
    _
  // Predicated region
  $region6: #{gqa_o_proj.1} parent=0 // pred_check
    _
  $region7: #{gqa_o_proj.1} parent=0 // pred_check_branch
    %10 = sbr.rel (0) target = $region9
  $region8: #{gqa_o_proj.1} parent=0 // pred_region
    _
  $region9: #{gqa_o_proj.1} parent=0 // pred_fallthru
    _
  %v11 = vld [vmem:[%s0] sm:$0xff]
  %v12 = vld [vmem:[%s0 + $0x8] sm:$0xff]
  %v13 = vld [vmem:[%s1] sm:$0xff]
  %v14 = vld [vmem:[%s1 + $0x8] sm:$0xff]
  %v15 = vld [vmem:[%s1 + $0x10] sm:$0xff]
  %v16 = vld [vmem:[%s1 + $0x18] sm:$0xff]
  %v17 = vld [vmem:[%s1 + $0x20] sm:$0xff]
  %v18 = vld [vmem:[%s1 + $0x28] sm:$0xff]
  %v19 = vld [vmem:[%s1 + $0x30] sm:$0xff]
  %v20 = vld [vmem:[%s1 + $0x38] sm:$0xff]
  %v21 = vld [vmem:[%s1 + $0x40] sm:$0xff]
  %v22 = vld [vmem:[%s1 + $0x48] sm:$0xff]
  %v23 = vld [vmem:[%s1 + $0x50] sm:$0xff]
  %v24 = vld [vmem:[%s1 + $0x58] sm:$0xff]
  %v25 = vld [vmem:[%s1 + $0x60] sm:$0xff]
  %v26 = vld [vmem:[%s1 + $0x68] sm:$0xff]
  %v27 = vld [vmem:[%s1 + $0x70] sm:$0xff]
  %v28 = vld [vmem:[%s1 + $0x78] sm:$0xff]
  %29 = vmatprep.subr.mxu0 0.0
  %30 = vmatpush1.msra.mxu0 %v13
  %31 = vmatprep.subr.mxu0 0.0
  %32 = vmatpush1.msra.mxu0 %v14
  %33 = vmatprep.subr.mxu0 0.0
  %34 = vmatpush1.msra.mxu0 %v15
  %35 = vmatprep.subr.mxu0 0.0
  %36 = vmatpush1.msra.mxu0 %v16
  %37 = vmatprep.subr.mxu0 0.0
  %38 = vmatpush1.msra.mxu0 %v17
  %39 = vmatprep.subr.mxu0 0.0
  %40 = vmatpush1.msra.mxu0 %v18
  %41 = vmatprep.subr.mxu0 0.0
  %42 = vmatpush1.msra.mxu0 %v19
  %43 = vmatprep.subr.mxu0 0.0
  %44 = vmatpush1.msra.mxu0 %v20
  %45 = vmatprep.subr.mxu0 0.0
  %46 = vmatpush1.msra.mxu0 %v21
  %47 = vmatprep.subr.mxu0 0.0
  %48 = vmatpush1.msra.mxu0 %v22
  %49 = vmatprep.subr.mxu0 0.0
  %50 = vmatpush1.msra.mxu0 %v23
  %51 = vmatprep.subr.mxu0 0.0
  %52 = vmatpush1.msra.mxu0 %v24
  %53 = vmatprep.subr.mxu0 0.0
  %54 = vmatpush1.msra.mxu0 %v25
  %55 = vmatprep.subr.mxu0 0.0
  %56 = vmatpush1.msra.mxu0 %v26
  %57 = vmatprep.subr.mxu0 0.0
  %58 = vmatpush1.msra.mxu0 %v27
  %59 = vmatprep.subr.mxu0 0.0
  %60 = vmatpush1.msra.mxu0 %v28
  %61 = vmatprep.subr.mxu0 0.0
  %62 = vmatpush1.msra.mxu0 0.0
  %63 = vmatprep.subr.mxu0 0.0
  %64 = vmatpush1.msra.mxu0 0.0
  %65 = vmatprep.subr.mxu0 0.0
  %66 = vmatpush1.msra.mxu0 0.0
  %67 = vmatprep.subr.mxu0 0.0
  %68 = vmatpush1.msra.mxu0 0.0
  %69 = vmatprep.subr.mxu0 0.0
  %70 = vmatpush1.msra.mxu0 0.0
  %71 = vmatprep.subr.mxu0 0.0
  %72 = vmatpush1.msra.mxu0 0.0
  %73 = vmatprep.subr.mxu0 0.0
  %74 = vmatpush1.msra.mxu0 0.0
  %75 = vmatprep.subr.mxu0 0.0
  %76 = vmatpush1.msra.mxu0 0.0
  %77 = vmatprep.subr.mxu0 0.0
  %78 = vmatpush1.msra.mxu0 0.0
  %79 = vmatprep.subr.mxu0 0.0
  %80 = vmatpush1.msra.mxu0 0.0
  %81 = vmatprep.subr.mxu0 0.0
  %82 = vmatpush1.msra.mxu0 0.0
  %83 = vmatprep.subr.mxu0 0.0
  %84 = vmatpush1.msra.mxu0 0.0
  %85 = vmatprep.subr.mxu0 0.0
  %86 = vmatpush1.msra.mxu0 0.0
  %87 = vmatprep.subr.mxu0 0.0
  %88 = vmatpush1.msra.mxu0 0.0
  %89 = vmatprep.subr.mxu0 0.0
  %90 = vmatpush1.msra.mxu0 0.0
  %91 = vmatprep.subr.mxu0 0.0
  %92 = vmatpush1.msra.mxu0 0.0
  %93 = vmatprep.mubr.f32.mxu0 0.0
  %94 = vmatmul.mubr.f32.gmra.mrb[0].mxu0 %v11
  %v95 = vpop.f32.mrb[0].mxu0
  %v96 = vadd.f32 0.0, %v95
  %v97 = vpop.f32.mrb[0].mxu0
  %98 = vmatprep.mubr.f32.mxu0 0.0
  %99 = vmatmul.mubr.f32.gmra.mrb[0].mxu0 %v12
  %v100 = vpop.f32.mrb[0].mxu0
  %v101 = vadd.f32 0.0, %v100
  %v102 = vpop.f32.mrb[0].mxu0
  %103 = vdwg.mxu0
  %104 = vst [vmem:[%s2] sm:$0xff] %v96
  %105 = vst [vmem:[%s2 + $0x8] sm:$0xff] %v101
  // Predicated region
  $region10: #{gqa_o_proj.1} parent=0 // pred_check
    _
  $region11: #{gqa_o_proj.1} parent=0 // pred_check_branch
    %107 = sbr.rel (0) target = $region13
  $region12: #{gqa_o_proj.1} parent=0 // pred_region
    _
  $region13: #{gqa_o_proj.1} parent=0 // pred_fallthru
    _
  // Predicated region
  $region14: #{gqa_o_proj.1} parent=0 // pred_check
    _
  $region15: #{gqa_o_proj.1} parent=0 // pred_check_branch
    %109 = sbr.rel (0) target = $region17
  $region16: #{gqa_o_proj.1} parent=0 // pred_region
    _
  $region17: #{gqa_o_proj.1} parent=0 // pred_fallthru
    _

</llo_original>
